<compile_context>
chip_gen: v6e
topology: v6e:2x2x1
jax: 0.10.0
libtpu: 0.0.40
codegen_flags: <defaults>
</compile_context>

<pallas_src>
import functools
import math

import jax
import jax.numpy as jnp
from jax.experimental import pallas as pl
from jax.experimental.pallas import tpu as pltpu


def _round_up(n, m):
    return ((n + m - 1) // m) * m


def _pick_tile(n, candidates=(256, 128, 64, 32, 16, 8)):
    for c in candidates:
        if n >= c and n % c == 0:
            return c
    return n


# ----------------------------------------------------------------------------
# Linear:  y = x @ W.T + b   (PyTorch nn.Linear semantics, W: (out, in)).
# Tiled over rows of x (parallel axis); W and b stay resident in VMEM;
# dot_general contracts K-vs-K so no transpose of the (O, K) weight is needed.
# ----------------------------------------------------------------------------
def _linear_kernel(x_ref, w_ref, b_ref, o_ref):
    o_ref[...] = (
        jax.lax.dot_general(
            x_ref[...], w_ref[...],
            dimension_numbers=(((1,), (1,)), ((), ())),
            preferred_element_type=jnp.float32,
        )
        + b_ref[...]
    )


def linear_pallas(x2d, w, b):
    M, K = x2d.shape
    O = w.shape[0]
    TM = _pick_tile(M, (512, 256, 128, 64, 32, 16, 8))
    return pl.pallas_call(
        _linear_kernel,
        out_shape=jax.ShapeDtypeStruct((M, O), jnp.float32),
        grid=(M // TM,),
        in_specs=[
            pl.BlockSpec((TM, K), lambda i: (i, 0)),
            pl.BlockSpec((O, K), lambda i: (0, 0)),   # weight resident
            pl.BlockSpec((1, O), lambda i: (0, 0)),   # bias resident
        ],
        out_specs=pl.BlockSpec((TM, O), lambda i: (i, 0)),
        compiler_params=pltpu.CompilerParams(
            dimension_semantics=("parallel",),
            vmem_limit_bytes=48 * 1024 * 1024,
        ),
    )(x2d, w, b.reshape(1, O))


# ----------------------------------------------------------------------------
# Banded (Longformer) attention.  One (batch, head, q-block) per grid step.
# K/V blocks are (1,1,S,D) with an index_map that ignores the q-block axis, so
# they stay resident across the inner axis; only the in-window (KB, D) slab is
# sliced out of them for the matmuls.
# ----------------------------------------------------------------------------
def _band_attn_kernel(q_ref, k_ref, v_ref, ctx_ref, attn_ref,
                      *, window, scale, tq, kb, max_start):
    qi = pl.program_id(2)
    q0 = qi * tq                                   # first query row of this block
    start = jnp.clip(q0 - window, 0, max_start)    # first key row of the band slab

    q = q_ref[0, 0]                                # (TQ, D)
    k_slab = k_ref[0, 0, pl.ds(start, kb), :]      # (KB, D)
    v_slab = v_ref[0, 0, pl.ds(start, kb), :]      # (KB, D)

    # scores over the band slab only; contract D-vs-D (no transpose of K).
    s = jax.lax.dot_general(
        q, k_slab,
        dimension_numbers=(((1,), (1,)), ((), ())),
        preferred_element_type=jnp.float32,
    ) * scale                                      # (TQ, KB)

    row = q0 + jax.lax.broadcasted_iota(jnp.int32, (tq, kb), 0)
    col = start + jax.lax.broadcasted_iota(jnp.int32, (tq, kb), 1)
    band = jnp.abs(row - col) <= window            # same band as create_attention_mask
    s = jnp.where(band, s, -jnp.inf)               # diagonal always in-band => row max finite

    m = jnp.max(s, axis=-1, keepdims=True)
    e = jnp.exp(s - m)
    denom = jnp.sum(e, axis=-1, keepdims=True)
    p = e / denom                                  # exact division (keeps rows summing to 1)

    attn_ref[0, 0] = p                                                         # banded slab
    ctx_ref[0, 0] = jnp.dot(p, v_slab, preferred_element_type=jnp.float32)     # (TQ, D)


def windowed_attention_pallas(q, k, v, window):
    B, H, S, D = q.shape
    scale = 1.0 / math.sqrt(float(D))

    TQ = _pick_tile(S)                 # query tile (== S at small shapes)
    nq = S // TQ
    KB = min(S, _round_up(TQ + 2 * window, 8))   # band slab width
    max_start = S - KB

    kernel = functools.partial(
        _band_attn_kernel, window=window, scale=scale, tq=TQ, kb=KB, max_start=max_start)

    ctx, attn_band = pl.pallas_call(
        kernel,
        out_shape=(
            jax.ShapeDtypeStruct((B, H, S, D), jnp.float32),
            jax.ShapeDtypeStruct((B, H, S, KB), jnp.float32),
        ),
        grid=(B, H, nq),
        in_specs=[
            pl.BlockSpec((1, 1, TQ, D), lambda b, h, i: (b, h, i, 0)),
            pl.BlockSpec((1, 1, S, D), lambda b, h, i: (b, h, 0, 0)),   # resident across i
            pl.BlockSpec((1, 1, S, D), lambda b, h, i: (b, h, 0, 0)),   # resident across i
        ],
        out_specs=(
            pl.BlockSpec((1, 1, TQ, D), lambda b, h, i: (b, h, i, 0)),
            pl.BlockSpec((1, 1, TQ, KB), lambda b, h, i: (b, h, i, 0)),
        ),
        compiler_params=pltpu.CompilerParams(
            dimension_semantics=("parallel", "parallel", "arbitrary"),
            vmem_limit_bytes=48 * 1024 * 1024,
        ),
    )(q, k, v)

    starts = jnp.clip(jnp.arange(nq, dtype=jnp.int32) * TQ - window, 0, max_start)
    return ctx, attn_band, starts, KB


def _band_to_dense(attn_band, band_starts, S):
    """Scatter the banded attention slab back to the dense (B,H,S,S) matrix
    the PyTorch module returns.  Pure layout op (identity when KB == S)."""
    B, H, _, KB = attn_band.shape
    if KB == S:
        return attn_band                      # slab already covers all columns, starts == 0
    nq = band_starts.shape[0]
    TQ = S // nq
    starts_rows = jnp.repeat(band_starts, TQ)                         # (S,)
    col = jnp.arange(S, dtype=jnp.int32)[None, :]                     # (1, S)
    idx = col - starts_rows[:, None]                                  # (S, S)
    valid = (idx >= 0) & (idx < KB)
    idxc = jnp.clip(idx, 0, KB - 1)
    gathered = jnp.take_along_axis(
        attn_band, jnp.broadcast_to(idxc[None, None], (B, H, S, S)), axis=-1)
    return jnp.where(valid[None, None], gathered, 0.0)


# ----------------------------------------------------------------------------
# Full module forward
# ----------------------------------------------------------------------------
def longformer_attention_forward(x, params, num_heads, attention_window):
    B, S, E = x.shape
    D = E // num_heads
    x2 = x.reshape(B * S, E)

    # Fused QKV projection: single pallas_call, x read from HBM once.
    wqkv = jnp.concatenate([params["wq"], params["wk"], params["wv"]], axis=0)  # (3E, E)
    bqkv = jnp.concatenate([params["bq"], params["bk"], params["bv"]], axis=0)  # (3E,)
    qkv = linear_pallas(x2, wqkv, bqkv)                                         # (B*S, 3E)
    q2, k2, v2 = qkv[:, :E], qkv[:, E:2 * E], qkv[:, 2 * E:]

    # (B*S, E) -> (B, H, S, D)
    # TODO(synk): head split/merge transposes are XLA glue; at real sizes bake the
    # (B,H,S,D) layout into the projection out_spec index_map (needs D % 128 == 0).
    def split_heads(t):
        return t.reshape(B, S, num_heads, D).transpose(0, 2, 1, 3)

    q, k, v = split_heads(q2), split_heads(k2), split_heads(v2)

    ctx, attn_band, band_starts, _ = windowed_attention_pallas(q, k, v, attention_window)
    attn = _band_to_dense(attn_band, band_starts, S)

    # (B, H, S, D) -> (B*S, E) and output projection.
    context = ctx.transpose(0, 2, 1, 3).reshape(B * S, E)
    out = linear_pallas(context, params["wo"], params["bo"])
    return out.reshape(B, S, E), attn


def init_params(key, embedding_dim):
    E = embedding_dim
    ks = jax.random.split(key, 8)
    scale = 1.0 / math.sqrt(E)  # matches nn.Linear default U(-1/sqrt(in), 1/sqrt(in))
    u = lambda k, shape: jax.random.uniform(k, shape, jnp.float32, -scale, scale)
    return {
        "wq": u(ks[0], (E, E)), "bq": u(ks[1], (E,)),
        "wk": u(ks[2], (E, E)), "bk": u(ks[3], (E,)),
        "wv": u(ks[4], (E, E)), "bv": u(ks[5], (E,)),
        "wo": u(ks[6], (E, E)), "bo": u(ks[7], (E,)),
    }


# Pure-JAX reference of the PyTorch module (for correctness checking only).
def reference_forward(x, params, num_heads, window):
    B, S, E = x.shape
    D = E // num_heads
    hp = jax.lax.Precision.HIGHEST

    def lin(t, w, b):
        return jnp.einsum("me,oe->mo", t.reshape(-1, E), w, precision=hp).reshape(B, S, -1) + b

    def heads(t):
        return t.reshape(B, S, num_heads, D).transpose(0, 2, 1, 3)

    q = heads(lin(x, params["wq"], params["bq"]))
    k = heads(lin(x, params["wk"], params["bk"]))
    v = heads(lin(x, params["wv"], params["bv"]))
    scores = jnp.einsum("bhqd,bhkd->bhqk", q, k, precision=hp) / jnp.sqrt(jnp.float32(D))
    i = jnp.arange(S)[:, None]
    j = jnp.arange(S)[None, :]
    mask = jnp.abs(i - j) <= window
    scores = jnp.where(mask[None, None], scores, -jnp.inf)
    attn = jax.nn.softmax(scores, axis=-1)
    ctx = jnp.einsum("bhqk,bhkd->bhqd", attn, v, precision=hp)
    ctx = ctx.transpose(0, 2, 1, 3).reshape(B, S, E)
    out = lin(ctx, params["wo"], params["bo"])
    return out, attn


if __name__ == "__main__":
    B, S, E = 2, 8, 32
    num_heads = 4
    attention_window = 2

    key = jax.random.PRNGKey(0)
    k_x, k_p = jax.random.split(key)
    x = jax.random.normal(k_x, (B, S, E), dtype=jnp.float32)
    params = init_params(k_p, E)

    fwd = jax.jit(longformer_attention_forward,
                  static_argnames=("num_heads", "attention_window"))
    out, attn = fwd(x, params, num_heads=num_heads, attention_window=attention_window)
    jax.block_until_ready((out, attn))

    assert out.shape == (B, S, E)
    assert attn.shape == (B, num_heads, S, S)
    # each attention row sums to 1
    assert bool(jnp.allclose(jnp.sum(attn, axis=-1), 1.0, atol=1e-5))

    # compare against the pure-JAX reference of the PyTorch module
    out_ref, attn_ref = reference_forward(x, params, num_heads, attention_window)
    assert bool(jnp.allclose(out, out_ref, atol=1e-3, rtol=1e-3))
    assert bool(jnp.allclose(attn, attn_ref, atol=1e-3, rtol=1e-3))

    print("KERNEL_OK")
</pallas_src>

<mosaic_0001>
module attributes {stable_mosaic.version = 11 : i64} {
  func.func @_linear_kernel(%arg0: i32, %arg1: memref<16x32xf32, #tpu.memory_space<vmem>>, %arg2: memref<96x32xf32, #tpu.memory_space<vmem>>, %arg3: memref<1x96xf32, #tpu.memory_space<vmem>>, %arg4: memref<16x96xf32, #tpu.memory_space<vmem>>) attributes {dimension_semantics = [#tpu.dimension_semantics<parallel>], iteration_bounds = array<i64: 1>, scalar_prefetch = 0 : i64, scratch_operands = 0 : i64, tpu.core_type = #tpu.core_type<tc>, window_params = [{transform_indices = @transform_0, window_bounds = array<i64: 16, 32>}, {pipeline_mode = #tpu.pipeline_mode<synchronous>, transform_indices = @transform_1, window_bounds = array<i64: 96, 32>}, {pipeline_mode = #tpu.pipeline_mode<synchronous>, transform_indices = @transform_2, window_bounds = array<i64: 1, 96>}, {transform_indices = @transform_3, window_bounds = array<i64: 16, 96>}]} {
    %c0 = arith.constant 0 : index
    %c0_0 = arith.constant 0 : index
    %0 = vector.load %arg1[%c0, %c0_0] : memref<16x32xf32, #tpu.memory_space<vmem>>, vector<16x32xf32>
    %c0_1 = arith.constant 0 : index
    %c0_2 = arith.constant 0 : index
    %1 = vector.load %arg2[%c0_1, %c0_2] : memref<96x32xf32, #tpu.memory_space<vmem>>, vector<96x32xf32>
    %cst = arith.constant dense<0.000000e+00> : vector<16x96xf32>
    %2 = tpu.matmul %0, %1, %cst {dimension_numbers = #tpu.dot_dimension_numbers<[1], [1], [0], [0], [0, 0, 1, 0], [], []>} : vector<16x32xf32>, vector<96x32xf32>, vector<16x96xf32> -> vector<16x96xf32>
    %c0_3 = arith.constant 0 : index
    %c0_4 = arith.constant 0 : index
    %3 = vector.load %arg3[%c0_3, %c0_4] : memref<1x96xf32, #tpu.memory_space<vmem>>, vector<1x96xf32>
    %4 = vector.broadcast %3 : vector<1x96xf32> to vector<16x96xf32>
    %5 = arith.addf %2, %4 : vector<16x96xf32>
    %c0_5 = arith.constant 0 : index
    %c0_6 = arith.constant 0 : index
    %6 = vector.load %arg4[%c0_5, %c0_6] : memref<16x96xf32, #tpu.memory_space<vmem>>, vector<16x96xf32>
    tpu.vector_store %arg4[%c0_5, %c0_6], %5 {strides = array<i32>} : memref<16x96xf32, #tpu.memory_space<vmem>>, vector<16x96xf32>,
    return
  }
  func.func @transform_0(%arg0: i32) -> (i32, i32) {
    %c0_i32 = arith.constant 0 : i32
    %c0_i32_0 = arith.constant 0 : i32
    return %arg0, %c0_i32 : i32, i32
  }
  func.func @transform_1(%arg0: i32) -> (i32, i32) {
    %c0_i32 = arith.constant 0 : i32
    %c0_i32_0 = arith.constant 0 : i32
    %c0_i32_1 = arith.constant 0 : i32
    return %c0_i32, %c0_i32_0 : i32, i32
  }
  func.func @transform_2(%arg0: i32) -> (i32, i32) {
    %c0_i32 = arith.constant 0 : i32
    %c0_i32_0 = arith.constant 0 : i32
    %c0_i32_1 = arith.constant 0 : i32
    return %c0_i32, %c0_i32_0 : i32, i32
  }
  func.func @transform_3(%arg0: i32) -> (i32, i32) {
    %c0_i32 = arith.constant 0 : i32
    %c0_i32_0 = arith.constant 0 : i32
    return %arg0, %c0_i32 : i32, i32
  }
}

module attributes {stable_mosaic.version = 11 : i64} {
  func.func @_band_attn_kernel(%arg0: i32, %arg1: i32, %arg2: i32, %arg3: memref<1x1x8x8xf32, #tpu.memory_space<vmem>>, %arg4: memref<1x1x8x8xf32, #tpu.memory_space<vmem>>, %arg5: memref<1x1x8x8xf32, #tpu.memory_space<vmem>>, %arg6: memref<1x1x8x8xf32, #tpu.memory_space<vmem>>, %arg7: memref<1x1x8x8xf32, #tpu.memory_space<vmem>>) attributes {dimension_semantics = [#tpu.dimension_semantics<parallel>, #tpu.dimension_semantics<parallel>, #tpu.dimension_semantics<arbitrary>], iteration_bounds = array<i64: 2, 4, 1>, scalar_prefetch = 0 : i64, scratch_operands = 0 : i64, tpu.core_type = #tpu.core_type<tc>, window_params = [{transform_indices = @transform_0, window_bounds = array<i64: 1, 1, 8, 8>}, {transform_indices = @transform_1, window_bounds = array<i64: 1, 1, 8, 8>}, {transform_indices = @transform_2, window_bounds = array<i64: 1, 1, 8, 8>}, {transform_indices = @transform_3, window_bounds = array<i64: 1, 1, 8, 8>}, {transform_indices = @transform_4, window_bounds = array<i64: 1, 1, 8, 8>}]} {
    %c8_i32 = arith.constant 8 : i32
    %0 = arith.muli %arg2, %c8_i32 : i32
    %c2_i32 = arith.constant 2 : i32
    %1 = arith.subi %0, %c2_i32 : i32
    %c0_i32 = arith.constant 0 : i32
    %c0_i32_0 = arith.constant 0 : i32
    %2 = arith.maxsi %c0_i32, %1 : i32
    %3 = arith.minsi %c0_i32_0, %2 : i32
    %c0 = arith.constant 0 : index
    %c0_1 = arith.constant 0 : index
    %c0_2 = arith.constant 0 : index
    %c0_3 = arith.constant 0 : index
    %4 = vector.load %arg3[%c0, %c0_1, %c0_2, %c0_3] : memref<1x1x8x8xf32, #tpu.memory_space<vmem>>, vector<1x1x8x8xf32>
    %5 = vector.shape_cast %4 : vector<1x1x8x8xf32> to vector<8x8xf32>
    %c0_4 = arith.constant 0 : index
    %c0_5 = arith.constant 0 : index
    %6 = arith.index_cast %3 : i32 to index
    %c0_6 = arith.constant 0 : index
    %7 = vector.load %arg4[%c0_4, %c0_5, %6, %c0_6] : memref<1x1x8x8xf32, #tpu.memory_space<vmem>>, vector<1x1x8x8xf32>
    %8 = vector.shape_cast %7 : vector<1x1x8x8xf32> to vector<8x8xf32>
    %c0_7 = arith.constant 0 : index
    %c0_8 = arith.constant 0 : index
    %9 = arith.index_cast %3 : i32 to index
    %c0_9 = arith.constant 0 : index
    %10 = vector.load %arg5[%c0_7, %c0_8, %9, %c0_9] : memref<1x1x8x8xf32, #tpu.memory_space<vmem>>, vector<1x1x8x8xf32>
    %11 = vector.shape_cast %10 : vector<1x1x8x8xf32> to vector<8x8xf32>
    %cst = arith.constant dense<0.000000e+00> : vector<8x8xf32>
    %12 = tpu.matmul %5, %8, %cst {dimension_numbers = #tpu.dot_dimension_numbers<[1], [1], [0], [0], [0, 0, 1, 0], [], []>} : vector<8x8xf32>, vector<8x8xf32>, vector<8x8xf32> -> vector<8x8xf32>
    %cst_10 = arith.constant 0.353553385 : f32
    %13 = vector.broadcast %cst_10 : f32 to vector<8x8xf32>
    %14 = arith.mulf %12, %13 : vector<8x8xf32>
    %15 = tpu.iota {dimensions = array<i32: 0>} : vector<8x8xi32>
    %16 = vector.broadcast %0 : i32 to vector<8x8xi32>
    %17 = arith.addi %16, %15 : vector<8x8xi32>
    %18 = tpu.iota {dimensions = array<i32: 1>} : vector<8x8xi32>
    %19 = vector.broadcast %3 : i32 to vector<8x8xi32>
    %20 = arith.addi %19, %18 : vector<8x8xi32>
    %21 = arith.subi %17, %20 : vector<8x8xi32>
    %22 = math.absi %21 : vector<8x8xi32>
    %c2_i32_11 = arith.constant 2 : i32
    %23 = vector.broadcast %c2_i32_11 : i32 to vector<8x8xi32>
    %24 = arith.cmpi sle, %22, %23 : vector<8x8xi32>
    %cst_12 = arith.constant 0xFF800000 : f32
    %25 = vector.broadcast %cst_12 : f32 to vector<8x8xf32>
    %26 = arith.select %24, %14, %25 : vector<8x8xi1>, vector<8x8xf32>
    %cst_13 = arith.constant dense<0xFF800000> : vector<8xf32>
    %27 = vector.multi_reduction <maximumf>, %26, %cst_13 [1] : vector<8x8xf32> to vector<8xf32>
    %28 = vector.shape_cast %27 : vector<8xf32> to vector<8x1xf32>
    %29 = vector.broadcast %28 : vector<8x1xf32> to vector<8x8xf32>
    %30 = arith.subf %26, %29 : vector<8x8xf32>
    %31 = math.exp %30 : vector<8x8xf32>
    %cst_14 = arith.constant dense<0.000000e+00> : vector<8xf32>
    %32 = vector.multi_reduction <add>, %31, %cst_14 [1] : vector<8x8xf32> to vector<8xf32>
    %33 = vector.shape_cast %32 : vector<8xf32> to vector<8x1xf32>
    %34 = vector.broadcast %33 : vector<8x1xf32> to vector<8x8xf32>
    %35 = arith.divf %31, %34 : vector<8x8xf32>
    %c0_15 = arith.constant 0 : index
    %c0_16 = arith.constant 0 : index
    %c0_17 = arith.constant 0 : index
    %c0_18 = arith.constant 0 : index
    %36 = vector.load %arg7[%c0_15, %c0_16, %c0_17, %c0_18] : memref<1x1x8x8xf32, #tpu.memory_space<vmem>>, vector<1x1x8x8xf32>
    %37 = vector.shape_cast %36 : vector<1x1x8x8xf32> to vector<8x8xf32>
    %38 = vector.shape_cast %35 : vector<8x8xf32> to vector<1x1x8x8xf32>
    tpu.vector_store %arg7[%c0_15, %c0_16, %c0_17, %c0_18], %38 {strides = array<i32>} : memref<1x1x8x8xf32, #tpu.memory_space<vmem>>, vector<1x1x8x8xf32>,
    %cst_19 = arith.constant dense<0.000000e+00> : vector<8x8xf32>
    %39 = tpu.matmul %35, %11, %cst_19 {dimension_numbers = #tpu.dot_dimension_numbers<[1], [0], [0], [1], [0, 0, 1, 1], [], []>} : vector<8x8xf32>, vector<8x8xf32>, vector<8x8xf32> -> vector<8x8xf32>
    %c0_20 = arith.constant 0 : index
    %c0_21 = arith.constant 0 : index
    %c0_22 = arith.constant 0 : index
    %c0_23 = arith.constant 0 : index
    %40 = vector.load %arg6[%c0_20, %c0_21, %c0_22, %c0_23] : memref<1x1x8x8xf32, #tpu.memory_space<vmem>>, vector<1x1x8x8xf32>
    %41 = vector.shape_cast %40 : vector<1x1x8x8xf32> to vector<8x8xf32>
    %42 = vector.shape_cast %39 : vector<8x8xf32> to vector<1x1x8x8xf32>
    tpu.vector_store %arg6[%c0_20, %c0_21, %c0_22, %c0_23], %42 {strides = array<i32>} : memref<1x1x8x8xf32, #tpu.memory_space<vmem>>, vector<1x1x8x8xf32>,
    return
  }
  func.func @transform_0(%arg0: i32, %arg1: i32, %arg2: i32) -> (i32, i32, i32, i32) {
    %c0_i32 = arith.constant 0 : i32
    %c0_i32_0 = arith.constant 0 : i32
    return %arg0, %arg1, %arg2, %c0_i32 : i32, i32, i32, i32
  }
  func.func @transform_1(%arg0: i32, %arg1: i32, %arg2: i32) -> (i32, i32, i32, i32) {
    %c0_i32 = arith.constant 0 : i32
    %c0_i32_0 = arith.constant 0 : i32
    %c0_i32_1 = arith.constant 0 : i32
    return %arg0, %arg1, %c0_i32, %c0_i32_0 : i32, i32, i32, i32
  }
  func.func @transform_2(%arg0: i32, %arg1: i32, %arg2: i32) -> (i32, i32, i32, i32) {
    %c0_i32 = arith.constant 0 : i32
    %c0_i32_0 = arith.constant 0 : i32
    %c0_i32_1 = arith.constant 0 : i32
    return %arg0, %arg1, %c0_i32, %c0_i32_0 : i32, i32, i32, i32
  }
  func.func @transform_3(%arg0: i32, %arg1: i32, %arg2: i32) -> (i32, i32, i32, i32) {
    %c0_i32 = arith.constant 0 : i32
    %c0_i32_0 = arith.constant 0 : i32
    return %arg0, %arg1, %arg2, %c0_i32 : i32, i32, i32, i32
  }
  func.func @transform_4(%arg0: i32, %arg1: i32, %arg2: i32) -> (i32, i32, i32, i32) {
    %c0_i32 = arith.constant 0 : i32
    %c0_i32_0 = arith.constant 0 : i32
    return %arg0, %arg1, %arg2, %c0_i32 : i32, i32, i32, i32
  }
}

module attributes {stable_mosaic.version = 11 : i64} {
  func.func @_linear_kernel(%arg0: i32, %arg1: memref<16x32xf32, #tpu.memory_space<vmem>>, %arg2: memref<32x32xf32, #tpu.memory_space<vmem>>, %arg3: memref<1x32xf32, #tpu.memory_space<vmem>>, %arg4: memref<16x32xf32, #tpu.memory_space<vmem>>) attributes {dimension_semantics = [#tpu.dimension_semantics<parallel>], iteration_bounds = array<i64: 1>, scalar_prefetch = 0 : i64, scratch_operands = 0 : i64, tpu.core_type = #tpu.core_type<tc>, window_params = [{transform_indices = @transform_0, window_bounds = array<i64: 16, 32>}, {pipeline_mode = #tpu.pipeline_mode<synchronous>, transform_indices = @transform_1, window_bounds = array<i64: 32, 32>}, {pipeline_mode = #tpu.pipeline_mode<synchronous>, transform_indices = @transform_2, window_bounds = array<i64: 1, 32>}, {transform_indices = @transform_3, window_bounds = array<i64: 16, 32>}]} {
    %c0 = arith.constant 0 : index
    %c0_0 = arith.constant 0 : index
    %0 = vector.load %arg1[%c0, %c0_0] : memref<16x32xf32, #tpu.memory_space<vmem>>, vector<16x32xf32>
    %c0_1 = arith.constant 0 : index
    %c0_2 = arith.constant 0 : index
    %1 = vector.load %arg2[%c0_1, %c0_2] : memref<32x32xf32, #tpu.memory_space<vmem>>, vector<32x32xf32>
    %cst = arith.constant dense<0.000000e+00> : vector<16x32xf32>
    %2 = tpu.matmul %0, %1, %cst {dimension_numbers = #tpu.dot_dimension_numbers<[1], [1], [0], [0], [0, 0, 1, 0], [], []>} : vector<16x32xf32>, vector<32x32xf32>, vector<16x32xf32> -> vector<16x32xf32>
    %c0_3 = arith.constant 0 : index
    %c0_4 = arith.constant 0 : index
    %3 = vector.load %arg3[%c0_3, %c0_4] : memref<1x32xf32, #tpu.memory_space<vmem>>, vector<1x32xf32>
    %4 = vector.broadcast %3 : vector<1x32xf32> to vector<16x32xf32>
    %5 = arith.addf %2, %4 : vector<16x32xf32>
    %c0_5 = arith.constant 0 : index
    %c0_6 = arith.constant 0 : index
    %6 = vector.load %arg4[%c0_5, %c0_6] : memref<16x32xf32, #tpu.memory_space<vmem>>, vector<16x32xf32>
    tpu.vector_store %arg4[%c0_5, %c0_6], %5 {strides = array<i32>} : memref<16x32xf32, #tpu.memory_space<vmem>>, vector<16x32xf32>,
    return
  }
  func.func @transform_0(%arg0: i32) -> (i32, i32) {
    %c0_i32 = arith.constant 0 : i32
    %c0_i32_0 = arith.constant 0 : i32
    return %arg0, %c0_i32 : i32, i32
  }
  func.func @transform_1(%arg0: i32) -> (i32, i32) {
    %c0_i32 = arith.constant 0 : i32
    %c0_i32_0 = arith.constant 0 : i32
    %c0_i32_1 = arith.constant 0 : i32
    return %c0_i32, %c0_i32_0 : i32, i32
  }
  func.func @transform_2(%arg0: i32) -> (i32, i32) {
    %c0_i32 = arith.constant 0 : i32
    %c0_i32_0 = arith.constant 0 : i32
    %c0_i32_1 = arith.constant 0 : i32
    return %c0_i32, %c0_i32_0 : i32, i32
  }
  func.func @transform_3(%arg0: i32) -> (i32, i32) {
    %c0_i32 = arith.constant 0 : i32
    %c0_i32_0 = arith.constant 0 : i32
    return %arg0, %c0_i32 : i32, i32
  }
}

</mosaic_0001>

<llo_original>
// kernel: longformer_attention_forward.3
$region0: #{longformer_attention_forward.3}
  #allocation0 [shape = 'u32[]', space=smem, size = 0x4, offset = 0x4, fixed_abs, tag = 'smem constant byte address 0x4 - core index']
  #allocation1 [shape = 'u32[144,128]{1,0:T(1,128)}', space=vmem, size = 0x12000, scoped, tag = 'internal scratch']
  %s0 = inlined_call_operand.vmem [shape: f32[16,32], index: 0, kind: input, shape index: {}]
  %s1 = inlined_call_operand.vmem [shape: f32[96,32], index: 1, kind: input, shape index: {}]
  %s2 = inlined_call_operand.vmem [shape: f32[1,96], index: 2, kind: input, shape index: {}]
  %s3 = inlined_call_operand.vmem [shape: f32[16,96], index: 3, kind: output, shape index: {}]
  %s4 = sld [smem:[#allocation0]]
  $region22: #{longformer_attention_forward.3} parent=0
    _
  %s6 = ssub.s32 1, %s4
  %s7 = scalar_select 0, %s6, %s4
  // Predicated region
  $region2: #{longformer_attention_forward.3} parent=0 // pred_check
    _
  $region3: #{longformer_attention_forward.3} parent=0 // pred_check_branch
    %9 = sbr.rel (0) target = $region5
  $region4: #{longformer_attention_forward.3} parent=0 // pred_region
    _
  $region5: #{longformer_attention_forward.3} parent=0 // pred_fallthru
    _
  // Predicated region
  $region6: #{longformer_attention_forward.3} parent=0 // pred_check
    _
  $region7: #{longformer_attention_forward.3} parent=0 // pred_check_branch
    %11 = sbr.rel (0) target = $region9
  $region8: #{longformer_attention_forward.3} parent=0 // pred_region
    _
  $region9: #{longformer_attention_forward.3} parent=0 // pred_fallthru
    _
  // Predicated region
  $region10: #{longformer_attention_forward.3} parent=0 // pred_check
    _
  $region11: #{longformer_attention_forward.3} parent=0 // pred_check_branch
    %13 = sbr.rel (0) target = $region13
  $region12: #{longformer_attention_forward.3} parent=0 // pred_region
    _
  $region13: #{longformer_attention_forward.3} parent=0 // pred_fallthru
    _
  %v14 = vld [vmem:[%s0] sm:$0xff]
  %v15 = vld [vmem:[%s0 + $0x8] sm:$0xff]
  %v16 = vld [vmem:[%s1] sm:$0xff]
  %v17 = vld [vmem:[%s1 + $0x8] sm:$0xff]
  %v18 = vld [vmem:[%s1 + $0x10] sm:$0xff]
  %v19 = vld [vmem:[%s1 + $0x18] sm:$0xff]
  %v20 = vld [vmem:[%s1 + $0x20] sm:$0xff]
  %v21 = vld [vmem:[%s1 + $0x28] sm:$0xff]
  %v22 = vld [vmem:[%s1 + $0x30] sm:$0xff]
  %v23 = vld [vmem:[%s1 + $0x38] sm:$0xff]
  %v24 = vld [vmem:[%s1 + $0x40] sm:$0xff]
  %v25 = vld [vmem:[%s1 + $0x48] sm:$0xff]
  %v26 = vld [vmem:[%s1 + $0x50] sm:$0xff]
  %v27 = vld [vmem:[%s1 + $0x58] sm:$0xff]
  %v28 = vld [vmem:[%s2] sm:$0x1]
  %v30 = vlaneseq
  %v31 = vshrl.u32 %v30, 7
  %v32 = vsub.s32 0, %v31
  %v33 = vrot.slane %v28, %v32
  %vm35 = vcmask 261120
  %v37 = vsel %vm35, %v14, 0
  %v40 = vsel %vm35, %v15, 0
  %v43 = vsel %vm35, %v16, 0
  %v46 = vsel %vm35, %v17, 0
  %v49 = vsel %vm35, %v18, 0
  %v52 = vsel %vm35, %v19, 0
  %v55 = vsel %vm35, %v20, 0
  %v58 = vsel %vm35, %v21, 0
  %v61 = vsel %vm35, %v22, 0
  %v64 = vsel %vm35, %v23, 0
  %v67 = vsel %vm35, %v24, 0
  %v70 = vsel %vm35, %v25, 0
  %v73 = vsel %vm35, %v26, 0
  %v76 = vsel %vm35, %v27, 0
  %78 = vmatprep.subr.mxu0 0.0
  %79 = vmatpush1.xpose.msra.mxu0 0.0
  %80 = vmatprep.subr.mxu0 0.0
  %81 = vmatpush1.xpose.msra.mxu0 0.0
  %82 = vmatprep.subr.mxu0 0.0
  %83 = vmatpush1.xpose.msra.mxu0 0.0
  %84 = vmatprep.subr.mxu0 0.0
  %85 = vmatpush1.xpose.msra.mxu0 0.0
  %86 = vmatprep.subr.mxu0 0.0
  %87 = vmatpush1.xpose.msra.mxu0 %v76
  %88 = vmatprep.subr.mxu0 0.0
  %89 = vmatpush1.xpose.msra.mxu0 %v73
  %90 = vmatprep.subr.mxu0 0.0
  %91 = vmatpush1.xpose.msra.mxu0 %v70
  %92 = vmatprep.subr.mxu0 0.0
  %93 = vmatpush1.xpose.msra.mxu0 %v67
  %94 = vmatprep.subr.mxu0 0.0
  %95 = vmatpush1.xpose.msra.mxu0 %v64
  %96 = vmatprep.subr.mxu0 0.0
  %97 = vmatpush1.xpose.msra.mxu0 %v61
  %98 = vmatprep.subr.mxu0 0.0
  %99 = vmatpush1.xpose.msra.mxu0 %v58
  %100 = vmatprep.subr.mxu0 0.0
  %101 = vmatpush1.xpose.msra.mxu0 %v55
  %102 = vmatprep.subr.mxu0 0.0
  %103 = vmatpush1.xpose.msra.mxu0 %v52
  %104 = vmatprep.subr.mxu0 0.0
  %105 = vmatpush1.xpose.msra.mxu0 %v49
  %106 = vmatprep.subr.mxu0 0.0
  %107 = vmatpush1.xpose.msra.mxu0 %v46
  %108 = vmatprep.subr.mxu0 0.0
  %109 = vmatpush1.xpose.msra.mxu0 %v43
  %110 = vmatprep.subr.mxu0 0.0
  %111 = vmatpush2.xpose.msra.mxu0 0.0
  %112 = vmatprep.subr.mxu0 0.0
  %113 = vmatpush2.xpose.msra.mxu0 0.0
  %114 = vmatprep.subr.mxu0 0.0
  %115 = vmatpush2.xpose.msra.mxu0 0.0
  %116 = vmatprep.subr.mxu0 0.0
  %117 = vmatpush2.xpose.msra.mxu0 0.0
  %118 = vmatprep.subr.mxu0 0.0
  %119 = vmatpush2.xpose.msra.mxu0 0.0
  %120 = vmatprep.subr.mxu0 0.0
  %121 = vmatpush2.xpose.msra.mxu0 0.0
  %122 = vmatprep.subr.mxu0 0.0
  %123 = vmatpush2.xpose.msra.mxu0 0.0
  %124 = vmatprep.subr.mxu0 0.0
  %125 = vmatpush2.xpose.msra.mxu0 0.0
  %126 = vmatprep.subr.mxu0 0.0
  %127 = vmatpush2.xpose.msra.mxu0 0.0
  %128 = vmatprep.subr.mxu0 0.0
  %129 = vmatpush2.xpose.msra.mxu0 0.0
  %130 = vmatprep.subr.mxu0 0.0
  %131 = vmatpush2.xpose.msra.mxu0 0.0
  %132 = vmatprep.subr.mxu0 0.0
  %133 = vmatpush2.xpose.msra.mxu0 0.0
  %134 = vmatprep.subr.mxu0 0.0
  %135 = vmatpush2.xpose.msra.mxu0 0.0
  %136 = vmatprep.subr.mxu0 0.0
  %137 = vmatpush2.xpose.msra.mxu0 0.0
  %138 = vmatprep.subr.mxu0 0.0
  %139 = vmatpush2.xpose.msra.mxu0 0.0
  %140 = vmatprep.subr.mxu0 0.0
  %141 = vmatpush2.xpose.msra.mxu0 0.0
  %142 = vmatprep.mubr.f32.mxu0 0.0
  %143 = vmatmul.mubr.f32.gmra.mxu0 %v37
  %v144 = vpop.f32.mrf.mxu0
  %v145 = vadd.f32 %v33, %v144
  %v146 = vpop.f32.mrf.mxu0
  %147 = vmatprep.mubr.f32.mxu0 0.0
  %148 = vmatmul.mubr.f32.gmra.mxu0 %v40
  %v149 = vpop.f32.mrf.mxu0
  %v150 = vadd.f32 %v33, %v149
  %v151 = vpop.f32.mrf.mxu0
  %152 = vdwg.mxu0
  %vm153 = vcmask 785408
  %154 = vst.msk [vmem:[%s3] sm:$0xff] %vm153, %v145
  %155 = vst.msk [vmem:[%s3 + $0x8] sm:$0xff] %vm153, %v150
  // Predicated region
  $region14: #{longformer_attention_forward.3} parent=0 // pred_check
    _
  $region15: #{longformer_attention_forward.3} parent=0 // pred_check_branch
    %157 = sbr.rel (0) target = $region17
  $region16: #{longformer_attention_forward.3} parent=0 // pred_region
    _
  $region17: #{longformer_attention_forward.3} parent=0 // pred_fallthru
    _
  // Predicated region
  $region18: #{longformer_attention_forward.3} parent=0 // pred_check
    _
  $region19: #{longformer_attention_forward.3} parent=0 // pred_check_branch
    %159 = sbr.rel (0) target = $region21
  $region20: #{longformer_attention_forward.3} parent=0 // pred_region
    _
  $region21: #{longformer_attention_forward.3} parent=0 // pred_fallthru
    _

// kernel: longformer_attention_forward.5
$region0: #{longformer_attention_forward.5}
  #allocation0 [shape = 'u32[]', space=smem, size = 0x4, offset = 0x4, fixed_abs, tag = 'smem constant byte address 0x4 - core index']
  #allocation1 [shape = 'u32[144,128]{1,0:T(1,128)}', space=vmem, size = 0x12000, scoped, tag = 'internal scratch']
  %s0 = inlined_call_operand.vmem [shape: f32[16,32], index: 0, kind: input, shape index: {}]
  %s1 = inlined_call_operand.vmem [shape: f32[32,32], index: 1, kind: input, shape index: {}]
  %s2 = inlined_call_operand.vmem [shape: f32[1,32], index: 2, kind: input, shape index: {}]
  %s3 = inlined_call_operand.hbm [shape: f32[16,32], index: 3, kind: output, shape index: {}]
  %s4 = sld [smem:[#allocation0]]
  $region22: #{longformer_attention_forward.5} parent=0
    _
  %s6 = ssub.s32 1, %s4
  %s7 = scalar_select 0, %s6, %s4
  $region1: #{longformer_attention_forward.5} parent=0
    #allocation2 [shape = 'u8[8192]{0}', space=vmem, size = 0x2000, scoped, tag = 'output window, operand 0, single buffered']
    #allocation3 [shape = 's32[1]{0}', space=sflag, size = 0x4, scoped, tag = 'scoped memory for longformer_attention_forward.5']
    %8 = vsyncpa [#allocation3], 0
    // Predicated region
    $region2: #{longformer_attention_forward.5} parent=1 // pred_check
      _
    $region3: #{longformer_attention_forward.5} parent=1 // pred_check_branch
      %10 = sbr.rel (0) target = $region5
    $region4: #{longformer_attention_forward.5} parent=1 // pred_region
      _
    $region5: #{longformer_attention_forward.5} parent=1 // pred_fallthru
      _
    // Predicated region
    $region6: #{longformer_attention_forward.5} parent=1 // pred_check
      _
    $region7: #{longformer_attention_forward.5} parent=1 // pred_check_branch
      %12 = sbr.rel (0) target = $region9
    $region8: #{longformer_attention_forward.5} parent=1 // pred_region
      _
    $region9: #{longformer_attention_forward.5} parent=1 // pred_fallthru
      _
    // Predicated region
    $region10: #{longformer_attention_forward.5} parent=1 // pred_check
      _
    $region11: #{longformer_attention_forward.5} parent=1 // pred_check_branch
      %14 = sbr.rel (0) target = $region13
    $region12: #{longformer_attention_forward.5} parent=1 // pred_region
      _
    $region13: #{longformer_attention_forward.5} parent=1 // pred_fallthru
      _
    %v15 = vld [vmem:[%s0] sm:$0xff]
    %v16 = vld [vmem:[%s0 + $0x8] sm:$0xff]
    %v17 = vld [vmem:[%s1] sm:$0xff]
    %v18 = vld [vmem:[%s1 + $0x8] sm:$0xff]
    %v19 = vld [vmem:[%s1 + $0x10] sm:$0xff]
    %v20 = vld [vmem:[%s1 + $0x18] sm:$0xff]
    %v21 = vld [vmem:[%s2] sm:$0x1]
    %v23 = vlaneseq
    %v24 = vshrl.u32 %v23, 7
    %v25 = vsub.s32 0, %v24
    %v26 = vrot.slane %v21, %v25
    %vm28 = vcmask 261120
    %v30 = vsel %vm28, %v15, 0
    %v33 = vsel %vm28, %v16, 0
    %v36 = vsel %vm28, %v17, 0
    %v39 = vsel %vm28, %v18, 0
    %v42 = vsel %vm28, %v19, 0
    %v45 = vsel %vm28, %v20, 0
    %47 = vmatprep.subr.mxu0 0.0
    %48 = vmatpush1.xpose.msra.mxu0 0.0
    %49 = vmatprep.subr.mxu0 0.0
    %50 = vmatpush1.xpose.msra.mxu0 0.0
    %51 = vmatprep.subr.mxu0 0.0
    %52 = vmatpush1.xpose.msra.mxu0 0.0
    %53 = vmatprep.subr.mxu0 0.0
    %54 = vmatpush1.xpose.msra.mxu0 0.0
    %55 = vmatprep.subr.mxu0 0.0
    %56 = vmatpush1.xpose.msra.mxu0 0.0
    %57 = vmatprep.subr.mxu0 0.0
    %58 = vmatpush1.xpose.msra.mxu0 0.0
    %59 = vmatprep.subr.mxu0 0.0
    %60 = vmatpush1.xpose.msra.mxu0 0.0
    %61 = vmatprep.subr.mxu0 0.0
    %62 = vmatpush1.xpose.msra.mxu0 0.0
    %63 = vmatprep.subr.mxu0 0.0
    %64 = vmatpush1.xpose.msra.mxu0 0.0
    %65 = vmatprep.subr.mxu0 0.0
    %66 = vmatpush1.xpose.msra.mxu0 0.0
    %67 = vmatprep.subr.mxu0 0.0
    %68 = vmatpush1.xpose.msra.mxu0 0.0
    %69 = vmatprep.subr.mxu0 0.0
    %70 = vmatpush1.xpose.msra.mxu0 0.0
    %71 = vmatprep.subr.mxu0 0.0
    %72 = vmatpush1.xpose.msra.mxu0 %v45
    %73 = vmatprep.subr.mxu0 0.0
    %74 = vmatpush1.xpose.msra.mxu0 %v42
    %75 = vmatprep.subr.mxu0 0.0
    %76 = vmatpush1.xpose.msra.mxu0 %v39
    %77 = vmatprep.subr.mxu0 0.0
    %78 = vmatpush1.xpose.msra.mxu0 %v36
    %79 = vmatprep.subr.mxu0 0.0
    %80 = vmatpush2.xpose.msra.mxu0 0.0
    %81 = vmatprep.subr.mxu0 0.0
    %82 = vmatpush2.xpose.msra.mxu0 0.0
    %83 = vmatprep.subr.mxu0 0.0
    %84 = vmatpush2.xpose.msra.mxu0 0.0
    %85 = vmatprep.subr.mxu0 0.0
    %86 = vmatpush2.xpose.msra.mxu0 0.0
    %87 = vmatprep.subr.mxu0 0.0
    %88 = vmatpush2.xpose.msra.mxu0 0.0
    %89 = vmatprep.subr.mxu0 0.0
    %90 = vmatpush2.xpose.msra.mxu0 0.0
    %91 = vmatprep.subr.mxu0 0.0
    %92 = vmatpush2.xpose.msra.mxu0 0.0
    %93 = vmatprep.subr.mxu0 0.0
    %94 = vmatpush2.xpose.msra.mxu0 0.0
    %95 = vmatprep.subr.mxu0 0.0
    %96 = vmatpush2.xpose.msra.mxu0 0.0
    %97 = vmatprep.subr.mxu0 0.0
    %98 = vmatpush2.xpose.msra.mxu0 0.0
    %99 = vmatprep.subr.mxu0 0.0
    %100 = vmatpush2.xpose.msra.mxu0 0.0
    %101 = vmatprep.subr.mxu0 0.0
    %102 = vmatpush2.xpose.msra.mxu0 0.0
    %103 = vmatprep.subr.mxu0 0.0
    %104 = vmatpush2.xpose.msra.mxu0 0.0
    %105 = vmatprep.subr.mxu0 0.0
    %106 = vmatpush2.xpose.msra.mxu0 0.0
    %107 = vmatprep.subr.mxu0 0.0
    %108 = vmatpush2.xpose.msra.mxu0 0.0
    %109 = vmatprep.subr.mxu0 0.0
    %110 = vmatpush2.xpose.msra.mxu0 0.0
    %111 = vmatprep.mubr.f32.mxu0 0.0
    %112 = vmatmul.mubr.f32.gmra.mxu0 %v30
    %v113 = vpop.f32.mrf.mxu0
    %v114 = vadd.f32 %v26, %v113
    %v115 = vpop.f32.mrf.mxu0
    %116 = vmatprep.mubr.f32.mxu0 0.0
    %117 = vmatmul.mubr.f32.gmra.mxu0 %v33
    %v118 = vpop.f32.mrf.mxu0
    %v119 = vadd.f32 %v26, %v118
    %v120 = vpop.f32.mrf.mxu0
    %121 = vdwg.mxu0
    %122 = vst.msk [vmem:[#allocation2] sm:$0xff] %vm28, %v114
    %123 = vst.msk [vmem:[#allocation2 + $0x8] sm:$0xff] %vm28, %v119
    // Predicated region
    $region14: #{longformer_attention_forward.5} parent=1 // pred_check
      _
    $region15: #{longformer_attention_forward.5} parent=1 // pred_check_branch
      %125 = sbr.rel (0) target = $region17
    $region16: #{longformer_attention_forward.5} parent=1 // pred_region
      %s127 = ssub.s32 256, 256
      %128 = vsyncadd [#allocation3], %s127
      %s129 = sshll.u32 [#allocation2], 4
      %s130 = int_to_ptr.vmem [resolvable:$true] %s129
      %135 = dma.vmem_to_hbm [thread:$0]  %s130, 256, %s3, [#allocation3], 128, 128, 8
    $region17: #{longformer_attention_forward.5} parent=1 // pred_fallthru
      _
    // Predicated region
    $region18: #{longformer_attention_forward.5} parent=1 // pred_check
      _
    $region19: #{longformer_attention_forward.5} parent=1 // pred_check_branch
      %137 = sbr.rel (0) target = $region21
    $region20: #{longformer_attention_forward.5} parent=1 // pred_region
      %138 = dma.done [#allocation3], 256
    $region21: #{longformer_attention_forward.5} parent=1 // pred_fallthru
      _
    %139 = vsyncpa [#allocation3], 1

// kernel: longformer_attention_forward.4
$region0: #{longformer_attention_forward.4}
  #allocation0 [shape = 'u32[]', space=smem, size = 0x4, offset = 0x4, fixed_abs, tag = 'smem constant byte address 0x4 - core index']
  #allocation1 [shape = 'u32[144,128]{1,0:T(1,128)}', space=vmem, size = 0x12000, scoped, tag = 'internal scratch']
  %s0 = inlined_call_operand.vmem [shape: f32[2,4,8,8], index: 0, kind: input, shape index: {}]
  %s1 = inlined_call_operand.vmem [shape: f32[2,4,8,8], index: 1, kind: input, shape index: {}]
  %s2 = inlined_call_operand.vmem [shape: f32[2,4,8,8], index: 2, kind: input, shape index: {}]
  %s3 = inlined_call_operand.vmem [shape: f32[2,4,8,8], index: 3, kind: output, shape index: {0}]
  %s4 = inlined_call_operand.hbm [shape: f32[2,4,8,8], index: 4, kind: output, shape index: {1}]
  %5 = xla_tuple %s3, %s4
  %s6 = sld [smem:[#allocation0]]
  $region53: #{longformer_attention_forward.4} parent=0
    _
  %s8 = ssub.s32 1, %s6
  %s9 = scalar_select 0, %s8, %s6
  $region1: #{longformer_attention_forward.4} parent=0
    #allocation2 [shape = 'u8[8192]{0}', space=vmem, size = 0x2000, scoped, tag = 'output window, operand 1']
    #allocation3 [shape = 's32[2]{0}', space=sflag, size = 0x8, scoped, tag = 'scoped memory for longformer_attention_forward.4']
    %10 = vsyncpa [#allocation3], 0
    %s11 = scalar_lea.sflag [#allocation3], 1
    %12 = vsyncpa %s11, 0
    loop: start=0, step=1, limit=10
    $region2: #{longformer_attention_forward.4} parent=1 // loop_pre_header
      _
    $region3: #{longformer_attention_forward.4} parent=1 // loop_header
      %s14 = sphi 0, %s18
      %p15 = scmp.ge.s32.totalorder %s14, 10
      %s21 = sphi 0, %s40
      %s22 = sphi 0, %s36
      %s23 = sphi 0, %s32
      %s24 = sphi 0, %s21
      %s25 = sphi 0, %s22
      %s26 = sphi 0, %s23
      %s27 = sphi 0, %s24
      %s28 = sphi 0, %s25
      %s29 = sphi 0, %s26
      %s47 = sphi 0, %s49
      %s50 = sphi 0, %s47
      %s51 = sphi 0, %s50
      %s67 = sphi 0, %s51
      %s75 = sphi 0, %s77
      %s78 = sphi 0, %s75
      %s79 = sphi 0, %s78
      %s95 = sphi 0, %s79
      %s103 = sphi 0, %s105
      %s106 = sphi 0, %s103
      %s107 = sphi 0, %s106
      %s123 = sphi 0, %s107
      %s133 = sphi 0, %s135
      %s136 = sphi 0, %s133
      %s137 = sphi 0, %s136
      %s153 = sphi 0, %s137
      %s163 = sphi 0, %s165
      %s166 = sphi 0, %s163
      %s167 = sphi 0, %s166
      %s183 = sphi 0, %s167
    $region4: #{longformer_attention_forward.4} parent=1 // loop_header_branch
      %17 = sbr.rel (%p15) target = $region8
    $region5: #{longformer_attention_forward.4} parent=1 // loop_body
      %s19 = ssub.s32 %s14, 1
      %s20 = ssub.s32 %s14, 2
      %s30 = sadd.s32 1, %s23
      %p31 = scmp.ge.s32.totalorder %s30, 1
      %s32 = scalar_select %p31, 0, %s30
      %s33 = sadd.s32 1, %s22
      %s34 = scalar_select %p31, %s33, %s22
      %p35 = scmp.ge.s32.totalorder %s34, 4
      %s36 = scalar_select %p35, 0, %s34
      %s37 = sadd.s32 1, %s21
      %s38 = scalar_select %p35, %s37, %s21
      %p39 = scmp.ge.s32.totalorder %s38, 2
      %s40 = scalar_select %p39, 0, %s38
      %s41 = ssub.s32 %s21, %s40
      %s42 = ssub.s32 %s22, %s36
      %s43 = sor.u32 %s41, %s42
      %s44 = ssub.s32 %s23, %s32
      %s45 = sor.u32 %s43, %s44
      %p46 = scmp.eq.s32.totalorder %s45, 0
      %s48 = sadd.s32 %s47, 1
      %s49 = scalar_select %p46, %s47, %s48
      %p52 = pneg %p46
      %p53 = scmp.eq.s32.totalorder %s14, 7
      %p54 = por %p52, %p53
      %p55 = scmp.ne.s32.totalorder %s47, %s50
      %p56 = scmp.eq.s32.totalorder %s14, 0
      %p57 = por %p55, %p56
      %p58 = scmp.ne.s32.totalorder %s47, %s50
      %p59 = scmp.eq.s32.totalorder %s19, 7
      %p60 = por %p58, %p59
      %p61 = scmp.ne.s32.totalorder %s50, %s51
      %p62 = scmp.eq.s32.totalorder %s19, 0
      %p63 = por %p61, %p62
      %p64 = scmp.ne.s32.totalorder %s50, %s51
      %p65 = scmp.eq.s32.totalorder %s20, 7
      %p66 = por %p64, %p65
      %p68 = scmp.ne.s32.totalorder %s51, %s67
      %p69 = scmp.eq.s32.totalorder %s20, 0
      %p70 = por %p68, %p69
      %s71 = ssub.s32 %s21, %s40
      %s72 = ssub.s32 %s22, %s36
      %s73 = sor.u32 %s71, %s72
      %p74 = scmp.eq.s32.totalorder %s73, 0
      %s76 = sadd.s32 %s75, 1
      %s77 = scalar_select %p74, %s75, %s76
      %p80 = pneg %p74
      %p81 = scmp.eq.s32.totalorder %s14, 7
      %p82 = por %p80, %p81
      %p83 = scmp.ne.s32.totalorder %s75, %s78
      %p84 = scmp.eq.s32.totalorder %s14, 0
      %p85 = por %p83, %p84
      %p86 = scmp.ne.s32.totalorder %s75, %s78
      %p87 = scmp.eq.s32.totalorder %s19, 7
      %p88 = por %p86, %p87
      %p89 = scmp.ne.s32.totalorder %s78, %s79
      %p90 = scmp.eq.s32.totalorder %s19, 0
      %p91 = por %p89, %p90
      %p92 = scmp.ne.s32.totalorder %s78, %s79
      %p93 = scmp.eq.s32.totalorder %s20, 7
      %p94 = por %p92, %p93
      %p96 = scmp.ne.s32.totalorder %s79, %s95
      %p97 = scmp.eq.s32.totalorder %s20, 0
      %p98 = por %p96, %p97
      %s99 = ssub.s32 %s21, %s40
      %s100 = ssub.s32 %s22, %s36
      %s101 = sor.u32 %s99, %s100
      %p102 = scmp.eq.s32.totalorder %s101, 0
      %s104 = sadd.s32 %s103, 1
      %s105 = scalar_select %p102, %s103, %s104
      %p108 = pneg %p102
      %p109 = scmp.eq.s32.totalorder %s14, 7
      %p110 = por %p108, %p109
      %p111 = scmp.ne.s32.totalorder %s103, %s106
      %p112 = scmp.eq.s32.totalorder %s14, 0
      %p113 = por %p111, %p112
      %p114 = scmp.ne.s32.totalorder %s103, %s106
      %p115 = scmp.eq.s32.totalorder %s19, 7
      %p116 = por %p114, %p115
      %p117 = scmp.ne.s32.totalorder %s106, %s107
      %p118 = scmp.eq.s32.totalorder %s19, 0
      %p119 = por %p117, %p118
      %p120 = scmp.ne.s32.totalorder %s106, %s107
      %p121 = scmp.eq.s32.totalorder %s20, 7
      %p122 = por %p120, %p121
      %p124 = scmp.ne.s32.totalorder %s107, %s123
      %p125 = scmp.eq.s32.totalorder %s20, 0
      %p126 = por %p124, %p125
      %s127 = ssub.s32 %s21, %s40
      %s128 = ssub.s32 %s22, %s36
      %s129 = sor.u32 %s127, %s128
      %s130 = ssub.s32 %s23, %s32
      %s131 = sor.u32 %s129, %s130
      %p132 = scmp.eq.s32.totalorder %s131, 0
      %s134 = sadd.s32 %s133, 1
      %s135 = scalar_select %p132, %s133, %s134
      %p138 = pneg %p132
      %p139 = scmp.eq.s32.totalorder %s14, 7
      %p140 = por %p138, %p139
      %p141 = scmp.ne.s32.totalorder %s133, %s136
      %p142 = scmp.eq.s32.totalorder %s14, 0
      %p143 = por %p141, %p142
      %p144 = scmp.ne.s32.totalorder %s133, %s136
      %p145 = scmp.eq.s32.totalorder %s19, 7
      %p146 = por %p144, %p145
      %p147 = scmp.ne.s32.totalorder %s136, %s137
      %p148 = scmp.eq.s32.totalorder %s19, 0
      %p149 = por %p147, %p148
      %p150 = scmp.ne.s32.totalorder %s136, %s137
      %p151 = scmp.eq.s32.totalorder %s20, 7
      %p152 = por %p150, %p151
      %p154 = scmp.ne.s32.totalorder %s137, %s153
      %p155 = scmp.eq.s32.totalorder %s20, 0
      %p156 = por %p154, %p155
      %s157 = ssub.s32 %s21, %s40
      %s158 = ssub.s32 %s22, %s36
      %s159 = sor.u32 %s157, %s158
      %s160 = ssub.s32 %s23, %s32
      %s161 = sor.u32 %s159, %s160
      %p162 = scmp.eq.s32.totalorder %s161, 0
      %s164 = sadd.s32 %s163, 1
      %s165 = scalar_select %p162, %s163, %s164
      %p168 = pneg %p162
      %p169 = scmp.eq.s32.totalorder %s14, 7
      %p170 = por %p168, %p169
      %p171 = scmp.ne.s32.totalorder %s163, %s166
      %p172 = scmp.eq.s32.totalorder %s14, 0
      %p173 = por %p171, %p172
      %p174 = scmp.ne.s32.totalorder %s163, %s166
      %p175 = scmp.eq.s32.totalorder %s19, 7
      %p176 = por %p174, %p175
      %p177 = scmp.ne.s32.totalorder %s166, %s167
      %p178 = scmp.eq.s32.totalorder %s19, 0
      %p179 = por %p177, %p178
      %p180 = scmp.ne.s32.totalorder %s166, %s167
      %p181 = scmp.eq.s32.totalorder %s20, 7
      %p182 = por %p180, %p181
      %p184 = scmp.ne.s32.totalorder %s167, %s183
      %p185 = scmp.eq.s32.totalorder %s20, 0
      %p186 = por %p184, %p185
      %p187 = scmp.le.s32.totalorder 1, %s14
      %p188 = scmp.lt.s32.totalorder %s14, 9
      %p189 = pnand %p187, %p188
      %p190 = pneg %p189
      // Predicated region
      $region9: #{longformer_attention_forward.4} parent=5 // pred_check
        _
      $region10: #{longformer_attention_forward.4} parent=5 // pred_check_branch
        %192 = sbr.rel (%p189) target = $region12
      $region11: #{longformer_attention_forward.4} parent=5 // pred_region
        %s193 = ssub.s32 %s14, 1
      $region12: #{longformer_attention_forward.4} parent=5 // pred_fallthru
        _
      %p194 = scmp.lt.s32.totalorder %s14, 8
      // Predicated region
      $region13: #{longformer_attention_forward.4} parent=5 // pred_check
        %p195 = pneg %p194
      $region14: #{longformer_attention_forward.4} parent=5 // pred_check_branch
        %197 = sbr.rel (%p195) target = $region16
      $region15: #{longformer_attention_forward.4} parent=5 // pred_region
        // Predicated region
        $region17: #{longformer_attention_forward.4} parent=15 // pred_check
          %p198 = pneg %p57
        $region18: #{longformer_attention_forward.4} parent=15 // pred_check_branch
          %200 = sbr.rel (%p198) target = $region20
        $region19: #{longformer_attention_forward.4} parent=15 // pred_region
          %p201 = scmp.lt.s32.totalorder %s21, 1
          %s202 = scalar_select %p201, %s21, 1
          %p203 = scmp.lt.s32.totalorder %s22, 3
          %s204 = scalar_select %p203, %s22, 3
          %p205 = scmp.lt.s32.totalorder %s23, 0
          %s206 = scalar_select %p205, %s23, 0
          %s207 = sadd.s32 %s206, %s204
          %s208 = smul.addr %s202, 4
          %s209 = sadd.s32 %s207, %s208
          %s210 = smul.addr %s209, 8
          %s211 = scalar_lea.vmem %s0, %s210
        $region20: #{longformer_attention_forward.4} parent=15 // pred_fallthru
          _
        // Predicated region
        $region21: #{longformer_attention_forward.4} parent=15 // pred_check
          %p212 = pneg %p85
        $region22: #{longformer_attention_forward.4} parent=15 // pred_check_branch
          %214 = sbr.rel (%p212) target = $region24
        $region23: #{longformer_attention_forward.4} parent=15 // pred_region
          %p215 = scmp.lt.s32.totalorder %s21, 1
          %s216 = scalar_select %p215, %s21, 1
          %p217 = scmp.lt.s32.totalorder %s22, 3
          %s218 = scalar_select %p217, %s22, 3
          %s219 = smul.addr %s216, 4
          %s220 = sadd.s32 %s218, %s219
          %s221 = smul.addr %s220, 8
          %s222 = scalar_lea.vmem %s1, %s221
        $region24: #{longformer_attention_forward.4} parent=15 // pred_fallthru
          _
        // Predicated region
        $region25: #{longformer_attention_forward.4} parent=15 // pred_check
          %p223 = pneg %p113
        $region26: #{longformer_attention_forward.4} parent=15 // pred_check_branch
          %225 = sbr.rel (%p223) target = $region28
        $region27: #{longformer_attention_forward.4} parent=15 // pred_region
          %p226 = scmp.lt.s32.totalorder %s21, 1
          %s227 = scalar_select %p226, %s21, 1
          %p228 = scmp.lt.s32.totalorder %s22, 3
          %s229 = scalar_select %p228, %s22, 3
          %s230 = smul.addr %s227, 4
          %s231 = sadd.s32 %s229, %s230
          %s232 = smul.addr %s231, 8
          %s233 = scalar_lea.vmem %s2, %s232
        $region28: #{longformer_attention_forward.4} parent=15 // pred_fallthru
          _
      $region16: #{longformer_attention_forward.4} parent=5 // pred_fallthru
        _
      %p234 = scmp.le.s32.totalorder 1, %s14
      %p235 = scmp.lt.s32.totalorder %s14, 9
      %p236 = pnand %p234, %p235
      %p237 = pneg %p236
      // Predicated region
      $region29: #{longformer_attention_forward.4} parent=5 // pred_check
        _
      $region30: #{longformer_attention_forward.4} parent=5 // pred_check_branch
        %239 = sbr.rel (%p236) target = $region32
      $region31: #{longformer_attention_forward.4} parent=5 // pred_region
        %s240 = ssub.s32 %s14, 1
        %p241 = scmp.lt.s32.totalorder %s24, 1
        %s242 = scalar_select %p241, %s24, 1
        %p243 = scmp.lt.s32.totalorder %s25, 3
        %s244 = scalar_select %p243, %s25, 3
        %p245 = scmp.lt.s32.totalorder %s26, 0
        %s246 = scalar_select %p245, %s26, 0
        %s247 = sadd.s32 %s246, %s244
        %s248 = smul.addr %s242, 4
        %s249 = sadd.s32 %s247, %s248
        %s250 = smul.addr %s249, 8
        %s251 = scalar_lea.vmem %s0, %s250
        %p252 = pneg %p63
        %p253 = pneg %p60
        %p254 = scmp.lt.s32.totalorder %s24, 1
        %s255 = scalar_select %p254, %s24, 1
        %p256 = scmp.lt.s32.totalorder %s25, 3
        %s257 = scalar_select %p256, %s25, 3
        %s258 = smul.addr %s255, 4
        %s259 = sadd.s32 %s257, %s258
        %s260 = smul.addr %s259, 8
        %s261 = scalar_lea.vmem %s1, %s260
        %p262 = pneg %p91
        %p263 = pneg %p88
        %p264 = scmp.lt.s32.totalorder %s24, 1
        %s265 = scalar_select %p264, %s24, 1
        %p266 = scmp.lt.s32.totalorder %s25, 3
        %s267 = scalar_select %p266, %s25, 3
        %s268 = smul.addr %s265, 4
        %s269 = sadd.s32 %s267, %s268
        %s270 = smul.addr %s269, 8
        %s271 = scalar_lea.vmem %s2, %s270
        %p272 = pneg %p119
        %p273 = pneg %p116
        %p274 = pneg %p149
        %p275 = pneg %p146
        %p276 = scmp.lt.s32.totalorder %s24, 1
        %s277 = scalar_select %p276, %s24, 1
        %p278 = scmp.lt.s32.totalorder %s25, 3
        %s279 = scalar_select %p278, %s25, 3
        %p280 = scmp.lt.s32.totalorder %s26, 0
        %s281 = scalar_select %p280, %s26, 0
        %s282 = sadd.s32 %s281, %s279
        %s283 = smul.addr %s277, 4
        %s284 = sadd.s32 %s282, %s283
        %s285 = smul.addr %s284, 8
        %s286 = scalar_lea.vmem %s3, %s285
        %p287 = pneg %p179
        %p288 = pneg %p176
        %s289 = sand.u32 %s166, 1
        %s290 = scalar_lea.sflag [#allocation3], %s289
        %s291 = sand.u32 %s166, 1
        %s292 = smul.addr %s291, 8
        %s293 = scalar_lea.vmem [#allocation2], %s292
        %p294 = scmp.lt.s32.totalorder %s24, 1
        %s295 = scalar_select %p294, %s24, 1
        %p296 = scmp.lt.s32.totalorder %s25, 3
        %s297 = scalar_select %p296, %s25, 3
        %p298 = scmp.lt.s32.totalorder %s26, 0
        %s299 = scalar_select %p298, %s26, 0
        %s300 = sadd.s32 %s299, %s297
        %s301 = smul.addr %s295, 4
        %s302 = sadd.s32 %s300, %s301
        %s303 = smul.addr %s302, 8
        %s304 = scalar_lea.vmem %s0, %s303
        %p305 = scmp.lt.s32.totalorder %s24, 1
        %s306 = scalar_select %p305, %s24, 1
        %p307 = scmp.lt.s32.totalorder %s25, 3
        %s308 = scalar_select %p307, %s25, 3
        %s309 = smul.addr %s306, 4
        %s310 = sadd.s32 %s308, %s309
        %s311 = smul.addr %s310, 8
        %s312 = scalar_lea.vmem %s1, %s311
        %p313 = scmp.lt.s32.totalorder %s24, 1
        %s314 = scalar_select %p313, %s24, 1
        %p315 = scmp.lt.s32.totalorder %s25, 3
        %s316 = scalar_select %p315, %s25, 3
        %s317 = smul.addr %s314, 4
        %s318 = sadd.s32 %s316, %s317
        %s319 = smul.addr %s318, 8
        %s320 = scalar_lea.vmem %s2, %s319
        %p321 = scmp.lt.s32.totalorder %s24, 1
        %s322 = scalar_select %p321, %s24, 1
        %p323 = scmp.lt.s32.totalorder %s25, 3
        %s324 = scalar_select %p323, %s25, 3
        %p325 = scmp.lt.s32.totalorder %s26, 0
        %s326 = scalar_select %p325, %s26, 0
        %s327 = sadd.s32 %s326, %s324
        %s328 = smul.addr %s322, 4
        %s329 = sadd.s32 %s327, %s328
        %s330 = smul.addr %s329, 8
        %s331 = scalar_lea.vmem %s3, %s330
        %s332 = smul.u32 %s26, 8
        %s333 = ssub.s32 %s332, 2
        %p334 = scmp.gt.s32.totalorder %s333, 0
        %s335 = scalar_select %p334, %s333, 0
        %p336 = scmp.lt.s32.totalorder %s335, 0
        %s337 = scalar_select %p336, %s335, 0
        %v338 = vld [vmem:[%s304] sm:$0xff]
        %s339 = scalar_lea.vmem %s312, %s337
        %v340 = vld [vmem:[%s339] sm:$0xff]
        %s341 = scalar_lea.vmem %s320, %s337
        %v342 = vld [vmem:[%s341] sm:$0xff]
        %vm343 = vcmask 64512
        %v345 = vsel %vm343, %v338, 0
        %v348 = vsel %vm343, %v340, 0
        %350 = vmatprep.subr.mxu0 0.0
        %351 = vmatpush1.xpose.msra.mxu0 0.0
        %352 = vmatprep.subr.mxu0 0.0
        %353 = vmatpush1.xpose.msra.mxu0 0.0
        %354 = vmatprep.subr.mxu0 0.0
        %355 = vmatpush1.xpose.msra.mxu0 0.0
        %356 = vmatprep.subr.mxu0 0.0
        %357 = vmatpush1.xpose.msra.mxu0 0.0
        %358 = vmatprep.subr.mxu0 0.0
        %359 = vmatpush1.xpose.msra.mxu0 0.0
        %360 = vmatprep.subr.mxu0 0.0
        %361 = vmatpush1.xpose.msra.mxu0 0.0
        %362 = vmatprep.subr.mxu0 0.0
        %363 = vmatpush1.xpose.msra.mxu0 0.0
        %364 = vmatprep.subr.mxu0 0.0
        %365 = vmatpush1.xpose.msra.mxu0 0.0
        %366 = vmatprep.subr.mxu0 0.0
        %367 = vmatpush1.xpose.msra.mxu0 0.0
        %368 = vmatprep.subr.mxu0 0.0
        %369 = vmatpush1.xpose.msra.mxu0 0.0
        %370 = vmatprep.subr.mxu0 0.0
        %371 = vmatpush1.xpose.msra.mxu0 0.0
        %372 = vmatprep.subr.mxu0 0.0
        %373 = vmatpush1.xpose.msra.mxu0 0.0
        %374 = vmatprep.subr.mxu0 0.0
        %375 = vmatpush1.xpose.msra.mxu0 0.0
        %376 = vmatprep.subr.mxu0 0.0
        %377 = vmatpush1.xpose.msra.mxu0 0.0
        %378 = vmatprep.subr.mxu0 0.0
        %379 = vmatpush1.xpose.msra.mxu0 0.0
        %380 = vmatprep.subr.mxu0 0.0
        %381 = vmatpush1.xpose.msra.mxu0 %v348
        %382 = vmatprep.subr.mxu0 0.0
        %383 = vmatpush2.xpose.msra.mxu0 0.0
        %384 = vmatprep.subr.mxu0 0.0
        %385 = vmatpush2.xpose.msra.mxu0 0.0
        %386 = vmatprep.subr.mxu0 0.0
        %387 = vmatpush2.xpose.msra.mxu0 0.0
        %388 = vmatprep.subr.mxu0 0.0
        %389 = vmatpush2.xpose.msra.mxu0 0.0
        %390 = vmatprep.subr.mxu0 0.0
        %391 = vmatpush2.xpose.msra.mxu0 0.0
        %392 = vmatprep.subr.mxu0 0.0
        %393 = vmatpush2.xpose.msra.mxu0 0.0
        %394 = vmatprep.subr.mxu0 0.0
        %395 = vmatpush2.xpose.msra.mxu0 0.0
        %396 = vmatprep.subr.mxu0 0.0
        %397 = vmatpush2.xpose.msra.mxu0 0.0
        %398 = vmatprep.subr.mxu0 0.0
        %399 = vmatpush2.xpose.msra.mxu0 0.0
        %400 = vmatprep.subr.mxu0 0.0
        %401 = vmatpush2.xpose.msra.mxu0 0.0
        %402 = vmatprep.subr.mxu0 0.0
        %403 = vmatpush2.xpose.msra.mxu0 0.0
        %404 = vmatprep.subr.mxu0 0.0
        %405 = vmatpush2.xpose.msra.mxu0 0.0
        %406 = vmatprep.subr.mxu0 0.0
        %407 = vmatpush2.xpose.msra.mxu0 0.0
        %408 = vmatprep.subr.mxu0 0.0
        %409 = vmatpush2.xpose.msra.mxu0 0.0
        %410 = vmatprep.subr.mxu0 0.0
        %411 = vmatpush2.xpose.msra.mxu0 0.0
        %412 = vmatprep.subr.mxu0 0.0
        %413 = vmatpush2.xpose.msra.mxu0 0.0
        %414 = vmatprep.mubr.f32.mxu0 0.0
        %415 = vmatmul.mubr.f32.gmra.mxu0 %v345
        %v416 = vpop.f32.mrf.mxu0
        %v417 = vadd.f32 0.0, %v416
        %v418 = vpop.f32.mrf.mxu0
        %419 = vdwg.mxu0
        %v420 = vmul.f32 %v417, 0.35355338
        %v421 = vlaneseq
        %v422 = vshrl.u32 %v421, 7
        %v423 = vstv %s332
        %v424 = vadd.s32 %v423, %v422
        %v425 = vlaneseq
        %v426 = vand.u32 %v425, 127
        %v427 = vstv %s337
        %v428 = vadd.s32 %v427, %v426
        %v429 = vsub.s32 %v424, %v428
        %vm430 = vcmp.lt.s32.totalorder %v429, 0
        %v431 = vsub.s32 0, %v429
        %v432 = vsel %vm430, %v431, %v429
        %vm433 = vcmp.le.s32.totalorder %v432, 2
        %v434 = vsel %vm433, %v420, -inf
        %v435 = vsel %vm343, %v434, -inf
        %436 = vmax.xlane.f32.xlu0 %v435
        %v437 = vpop.xlane.xlu0 %436
        %v438 = vsub.f32 %v434, %v437
        %v439 = vmul.f32 %v438, 1.442695
        %v440 = vpow.pop %v439
        %v441 = vsel %vm343, %v440, 0.0
        %442 = vadd.xlane.f32.xlu0 %v441
        %v443 = vpop.xlane.xlu0 %442
        %v444 = vrcp.pop %v443
        %v445 = vmul.f32 %v440, %v444
        %446 = vst.msk [vmem:[%s293] sm:$0xff] %vm343, %v445
        %v448 = vsel %vm343, %v445, 0
        %450 = vmatprep.subr.mxu0 0.0
        %451 = vmatpush1.msra.mxu0 0.0
        %452 = vmatprep.subr.mxu0 0.0
        %453 = vmatpush1.msra.mxu0 0.0
        %454 = vmatprep.subr.mxu0 0.0
        %455 = vmatpush1.msra.mxu0 0.0
        %456 = vmatprep.subr.mxu0 0.0
        %457 = vmatpush1.msra.mxu0 0.0
        %458 = vmatprep.subr.mxu0 0.0
        %459 = vmatpush1.msra.mxu0 0.0
        %460 = vmatprep.subr.mxu0 0.0
        %461 = vmatpush1.msra.mxu0 0.0
        %462 = vmatprep.subr.mxu0 0.0
        %463 = vmatpush1.msra.mxu0 0.0
        %464 = vmatprep.subr.mxu0 0.0
        %465 = vmatpush1.msra.mxu0 0.0
        %466 = vmatprep.subr.mxu0 0.0
        %467 = vmatpush1.msra.mxu0 0.0
        %468 = vmatprep.subr.mxu0 0.0
        %469 = vmatpush1.msra.mxu0 0.0
        %470 = vmatprep.subr.mxu0 0.0
        %471 = vmatpush1.msra.mxu0 0.0
        %472 = vmatprep.subr.mxu0 0.0
        %473 = vmatpush1.msra.mxu0 0.0
        %474 = vmatprep.subr.mxu0 0.0
        %475 = vmatpush1.msra.mxu0 0.0
        %476 = vmatprep.subr.mxu0 0.0
        %477 = vmatpush1.msra.mxu0 0.0
        %478 = vmatprep.subr.mxu0 0.0
        %479 = vmatpush1.msra.mxu0 0.0
        %480 = vmatprep.subr.mxu0 0.0
        %481 = vmatpush1.msra.mxu0 %v342
        %482 = vmatprep.subr.mxu0 0.0
        %483 = vmatpush2.msra.mxu0 0.0
        %484 = vmatprep.subr.mxu0 0.0
        %485 = vmatpush2.msra.mxu0 0.0
        %486 = vmatprep.subr.mxu0 0.0
        %487 = vmatpush2.msra.mxu0 0.0
        %488 = vmatprep.subr.mxu0 0.0
        %489 = vmatpush2.msra.mxu0 0.0
        %490 = vmatprep.subr.mxu0 0.0
        %491 = vmatpush2.msra.mxu0 0.0
        %492 = vmatprep.subr.mxu0 0.0
        %493 = vmatpush2.msra.mxu0 0.0
        %494 = vmatprep.subr.mxu0 0.0
        %495 = vmatpush2.msra.mxu0 0.0
        %496 = vmatprep.subr.mxu0 0.0
        %497 = vmatpush2.msra.mxu0 0.0
        %498 = vmatprep.subr.mxu0 0.0
        %499 = vmatpush2.msra.mxu0 0.0
        %500 = vmatprep.subr.mxu0 0.0
        %501 = vmatpush2.msra.mxu0 0.0
        %502 = vmatprep.subr.mxu0 0.0
        %503 = vmatpush2.msra.mxu0 0.0
        %504 = vmatprep.subr.mxu0 0.0
        %505 = vmatpush2.msra.mxu0 0.0
        %506 = vmatprep.subr.mxu0 0.0
        %507 = vmatpush2.msra.mxu0 0.0
        %508 = vmatprep.subr.mxu0 0.0
        %509 = vmatpush2.msra.mxu0 0.0
        %510 = vmatprep.subr.mxu0 0.0
        %511 = vmatpush2.msra.mxu0 0.0
        %512 = vmatprep.subr.mxu0 0.0
        %513 = vmatpush2.msra.mxu0 0.0
        %514 = vmatprep.mubr.f32.mxu0 0.0
        %515 = vmatmul.mubr.f32.gmra.mxu0 %v448
        %v516 = vpop.f32.mrf.mxu0
        %v517 = vadd.f32 0.0, %v516
        %v518 = vpop.f32.mrf.mxu0
        %519 = vdwg.mxu0
        %520 = vst.msk [vmem:[%s331] sm:$0xff] %vm343, %v517
        %p521 = scmp.lt.s32.totalorder %s24, 1
        %s522 = scalar_select %p521, %s24, 1
        %p523 = scmp.lt.s32.totalorder %s25, 3
        %s524 = scalar_select %p523, %s25, 3
        %p525 = scmp.lt.s32.totalorder %s26, 0
        %s526 = scalar_select %p525, %s26, 0
        %s527 = sadd.s32 %s526, %s524
        %s528 = smul.addr %s522, 4
        %s529 = sadd.s32 %s527, %s528
        %s530 = smul.addr %s529, 8
        %s531 = scalar_lea.vmem %s3, %s530
        %s532 = sand.u32 %s166, 1
        %s533 = scalar_lea.sflag [#allocation3], %s532
        %s534 = sand.u32 %s166, 1
        %s535 = smul.addr %s534, 8
        %s536 = scalar_lea.vmem [#allocation2], %s535
        // Predicated region
        $region33: #{longformer_attention_forward.4} parent=31 // pred_check
          %p537 = pneg %p146
        $region34: #{longformer_attention_forward.4} parent=31 // pred_check_branch
          %539 = sbr.rel (%p537) target = $region36
        $region35: #{longformer_attention_forward.4} parent=31 // pred_region
          _
        $region36: #{longformer_attention_forward.4} parent=31 // pred_fallthru
          _
        // Predicated region
        $region37: #{longformer_attention_forward.4} parent=31 // pred_check
          %p540 = pneg %p176
        $region38: #{longformer_attention_forward.4} parent=31 // pred_check_branch
          %542 = sbr.rel (%p540) target = $region40
        $region39: #{longformer_attention_forward.4} parent=31 // pred_region
          %s544 = ssub.s32 128, 128
          %545 = vsyncadd %s533, %s544
          %s546 = sadd.s32 %s26, %s25
          %s547 = smul.addr %s24, 4
          %s548 = sadd.s32 %s546, %s547
          %s549 = smul.addr %s548, 128
          %s550 = scalar_lea.hbm %s4, %s549
          %s552 = sshll.u32 %s536, 4
          %s553 = int_to_ptr.vmem [resolvable:$true] %s552
          %555 = dma.vmem_to_hbm [thread:$0]  %s553, 128, %s550, %s533
        $region40: #{longformer_attention_forward.4} parent=31 // pred_fallthru
          _
      $region32: #{longformer_attention_forward.4} parent=5 // pred_fallthru
        _
      %p556 = scmp.le.s32.totalorder 2, %s14
      // Predicated region
      $region41: #{longformer_attention_forward.4} parent=5 // pred_check
        %p557 = pneg %p556
      $region42: #{longformer_attention_forward.4} parent=5 // pred_check_branch
        %559 = sbr.rel (%p557) target = $region44
      $region43: #{longformer_attention_forward.4} parent=5 // pred_region
        %s560 = ssub.s32 %s14, 2
        // Predicated region
        $region45: #{longformer_attention_forward.4} parent=43 // pred_check
          %p561 = pneg %p152
        $region46: #{longformer_attention_forward.4} parent=43 // pred_check_branch
          %563 = sbr.rel (%p561) target = $region48
        $region47: #{longformer_attention_forward.4} parent=43 // pred_region
          %p564 = scmp.lt.s32.totalorder %s27, 1
          %s565 = scalar_select %p564, %s27, 1
          %p566 = scmp.lt.s32.totalorder %s28, 3
          %s567 = scalar_select %p566, %s28, 3
          %p568 = scmp.lt.s32.totalorder %s29, 0
          %s569 = scalar_select %p568, %s29, 0
          %s570 = sadd.s32 %s569, %s567
          %s571 = smul.addr %s565, 4
          %s572 = sadd.s32 %s570, %s571
          %s573 = smul.addr %s572, 8
          %s574 = scalar_lea.vmem %s3, %s573
        $region48: #{longformer_attention_forward.4} parent=43 // pred_fallthru
          _
        // Predicated region
        $region49: #{longformer_attention_forward.4} parent=43 // pred_check
          %p575 = pneg %p182
        $region50: #{longformer_attention_forward.4} parent=43 // pred_check_branch
          %577 = sbr.rel (%p575) target = $region52
        $region51: #{longformer_attention_forward.4} parent=43 // pred_region
          %s578 = sand.u32 %s167, 1
          %s579 = scalar_lea.sflag [#allocation3], %s578
          %s580 = sand.u32 %s167, 1
          %s581 = smul.addr %s580, 8
          %s582 = scalar_lea.vmem [#allocation2], %s581
          %583 = dma.done %s579, 128
        $region52: #{longformer_attention_forward.4} parent=43 // pred_fallthru
          _
      $region44: #{longformer_attention_forward.4} parent=5 // pred_fallthru
        _
    $region6: #{longformer_attention_forward.4} parent=1 // loop_footer
      %s18 = sadd.s32 1, %s14
    $region7: #{longformer_attention_forward.4} parent=1 // loop_footer_branch
      %13 = sbr.rel target = $region3
    $region8: #{longformer_attention_forward.4} parent=1 // loop_exit
      _
    %584 = vsyncpa [#allocation3], 1
    %s585 = scalar_lea.sflag [#allocation3], 1
    %586 = vsyncpa %s585, 1

</llo_original>
